<compile_context>
chip_gen: v6e
topology: v6e:2x2x1
jax: 0.10.0
libtpu: 0.0.40
codegen_flags: <defaults>
</compile_context>

<pallas_src>
import jax
import jax.numpy as jnp
from jax.experimental import pallas as pl
from jax.experimental.pallas import tpu as pltpu

N_MODAL = 2
EMB = 64
IN_FEATURES = N_MODAL * EMB   # 128
HID = EMB                     # 64
OUT = EMB                     # 64
HID_PAD = 128                 # lane-dense hidden width (VMEM-only, free)


def _round8(n):
    return max(8, ((int(n) + 7) // 8) * 8)


def _mlp_kernel(x_ref, w1_ref, b1_ref, w2_ref, b2_ref, o_ref):
    # linear_1: [tb, 128] @ [128, 128] + [1, 128]   (cols 64: are zero-padded)
    h = jnp.dot(x_ref[...], w1_ref[...], preferred_element_type=jnp.float32)
    h = jnp.maximum(h + b1_ref[...], 0.0)          # relu_1 in f32 (padded cols stay 0)
    # linear_2: [tb, 128] @ [128, 64] + [1, 64]     (no relu_2, matching forward())
    # In bf16 mode this astype downcasts the f32 activations before the MXU
    # (intended; accumulation stays f32).
    y = jnp.dot(h.astype(w2_ref.dtype), w2_ref[...],
                preferred_element_type=jnp.float32)
    o_ref[...] = (y + b2_ref[...]).astype(o_ref.dtype)


def _pad_params(w1, b1, w2, b2, io_dtype):
    """Zero-pad the hidden dim to 128 (numerically inert: zero rows/cols/bias)."""
    w1p = jnp.zeros((IN_FEATURES, HID_PAD), io_dtype).at[:, :HID].set(
        w1.astype(io_dtype))
    b1p = jnp.zeros((1, HID_PAD), jnp.float32).at[:, :HID].set(
        b1.reshape(1, HID).astype(jnp.float32))
    w2p = jnp.zeros((HID_PAD, OUT), io_dtype).at[:HID, :].set(
        w2.astype(io_dtype))
    b2p = b2.reshape(1, OUT).astype(jnp.float32)
    return w1p, b1p, w2p, b2p


def mlp_multimodal(x, w1, b1, w2, b2, *, tb=2048, io_dtype=None):
    """x: [B, 128]; w1: [128, 64]; b1: [64]; w2: [64, 64]; b2: [64] -> [B, 64].

    io_dtype: dtype carried through HBM for x / W / y (f32 default matches the
    PyTorch reference; jnp.bfloat16 halves HBM traffic, accumulation stays f32).
    """
    B, F_in = x.shape
    assert F_in == IN_FEATURES
    io_dtype = x.dtype if io_dtype is None else jnp.dtype(io_dtype)

    # Adaptive batch tile: multiple of 8 (f32 sublane), never larger than the
    # 8-rounded batch, and capped so we get >= 2 grid steps when B allows it
    # (v7x megacore: batch is the only "parallel" axis).
    tb = max(8, min(int(tb), _round8(B)))
    if B >= 16:
        tb = min(tb, _round8(-(-B // 2)))
    tb = _round8(tb)
    n_tiles = pl.cdiv(B, tb)   # ragged final tile handled by Pallas DMA clipping

    xk = x.astype(io_dtype)
    w1p, b1p, w2p, b2p = _pad_params(w1, b1, w2, b2, io_dtype)

    itemsize = jnp.dtype(io_dtype).itemsize
    cost = pl.CostEstimate(
        flops=2 * B * (IN_FEATURES * HID + HID * OUT),
        transcendentals=0,
        bytes_accessed=B * (IN_FEATURES + OUT) * itemsize
        + (IN_FEATURES * HID + HID * OUT) * itemsize,
    )

    out = pl.pallas_call(
        _mlp_kernel,
        out_shape=jax.ShapeDtypeStruct((B, OUT), io_dtype),
        grid_spec=pltpu.PrefetchScalarGridSpec(
            num_scalar_prefetch=0,
            grid=(n_tiles,),
            in_specs=[
                pl.BlockSpec((tb, IN_FEATURES), lambda i: (i, 0)),       # x tile
                pl.BlockSpec((IN_FEATURES, HID_PAD), lambda i: (0, 0)),  # W1 (VMEM-resident)
                pl.BlockSpec((1, HID_PAD), lambda i: (0, 0)),            # b1
                pl.BlockSpec((HID_PAD, OUT), lambda i: (0, 0)),          # W2
                pl.BlockSpec((1, OUT), lambda i: (0, 0)),                # b2
            ],
            out_specs=pl.BlockSpec((tb, OUT), lambda i: (i, 0)),         # no column padding
        ),
        compiler_params=pltpu.CompilerParams(
            dimension_semantics=("parallel",),   # batch tiles shard across TCs on v7x
        ),
        cost_estimate=cost,
    )(xk, w1p, b1p, w2p, b2p)

    return out


def init_params(key):
    """Deterministic init matching nn.Linear's default U(-1/sqrt(fan_in), ...)."""
    k1, k2, k3, k4 = jax.random.split(key, 4)
    bound1 = 1.0 / jnp.sqrt(IN_FEATURES)
    bound2 = 1.0 / jnp.sqrt(HID)
    # stored as [in, out] (transposed from PyTorch's [out, in])
    w1 = jax.random.uniform(k1, (IN_FEATURES, HID), jnp.float32, -bound1, bound1)
    b1 = jax.random.uniform(k2, (HID,), jnp.float32, -bound1, bound1)
    w2 = jax.random.uniform(k3, (HID, OUT), jnp.float32, -bound2, bound2)
    b2 = jax.random.uniform(k4, (OUT,), jnp.float32, -bound2, bound2)
    return w1, b1, w2, b2


if __name__ == "__main__":
    key = jax.random.PRNGKey(0)
    kx, kp = jax.random.split(key)

    # small batch, deliberately NOT a multiple of the tile size to exercise the
    # ragged final-block path (no wrapper-side padding anymore)
    B = 20
    x = jax.random.normal(kx, (B, IN_FEATURES), jnp.float32)
    w1, b1, w2, b2 = init_params(kp)

    # pure-JAX reference
    ref = jnp.maximum(x @ w1 + b1, 0.0) @ w2 + b2

    # f32 path (exact-mode, matches the PyTorch forward)
    y = mlp_multimodal(x, w1, b1, w2, b2)
    y = jax.block_until_ready(y)
    assert y.shape == (B, OUT)
    assert jnp.allclose(y, ref, atol=1e-5, rtol=1e-5), "f32 mismatch vs reference"

    # bf16 I/O path (halved HBM traffic; f32 accumulation) — loose tolerance
    y_bf16 = mlp_multimodal(x, w1, b1, w2, b2, io_dtype=jnp.bfloat16)
    y_bf16 = jax.block_until_ready(y_bf16)
    assert y_bf16.shape == (B, OUT)
    assert jnp.all(jnp.isfinite(y_bf16.astype(jnp.float32)))
    assert jnp.allclose(y_bf16.astype(jnp.float32), ref, atol=1e-1, rtol=1e-1), \
        "bf16 mismatch vs reference"

    print("KERNEL_OK")
</pallas_src>

<mosaic_0001>
module attributes {stable_mosaic.version = 11 : i64} {
  func.func @_mlp_kernel(%arg0: i32, %arg1: memref<16x128xf32, #tpu.memory_space<vmem>>, %arg2: memref<128x128xf32, #tpu.memory_space<vmem>>, %arg3: memref<1x128xf32, #tpu.memory_space<vmem>>, %arg4: memref<128x64xf32, #tpu.memory_space<vmem>>, %arg5: memref<1x64xf32, #tpu.memory_space<vmem>>, %arg6: memref<16x64xf32, #tpu.memory_space<vmem>>) attributes {dimension_semantics = [#tpu.dimension_semantics<parallel>], iteration_bounds = array<i64: 2>, scalar_prefetch = 0 : i64, scratch_operands = 0 : i64, tpu.core_type = #tpu.core_type<tc>, window_params = [{transform_indices = @transform_0, window_bounds = array<i64: 16, 128>}, {pipeline_mode = #tpu.pipeline_mode<synchronous>, transform_indices = @transform_1, window_bounds = array<i64: 128, 128>}, {pipeline_mode = #tpu.pipeline_mode<synchronous>, transform_indices = @transform_2, window_bounds = array<i64: 1, 128>}, {pipeline_mode = #tpu.pipeline_mode<synchronous>, transform_indices = @transform_3, window_bounds = array<i64: 128, 64>}, {pipeline_mode = #tpu.pipeline_mode<synchronous>, transform_indices = @transform_4, window_bounds = array<i64: 1, 64>}, {transform_indices = @transform_5, window_bounds = array<i64: 16, 64>}]} {
    %c0 = arith.constant 0 : index
    %c0_0 = arith.constant 0 : index
    %0 = vector.load %arg1[%c0, %c0_0] : memref<16x128xf32, #tpu.memory_space<vmem>>, vector<16x128xf32>
    %c0_1 = arith.constant 0 : index
    %c0_2 = arith.constant 0 : index
    %1 = vector.load %arg2[%c0_1, %c0_2] : memref<128x128xf32, #tpu.memory_space<vmem>>, vector<128x128xf32>
    %cst = arith.constant dense<0.000000e+00> : vector<16x128xf32>
    %2 = tpu.matmul %0, %1, %cst {dimension_numbers = #tpu.dot_dimension_numbers<[1], [0], [0], [1], [0, 0, 1, 1], [], []>} : vector<16x128xf32>, vector<128x128xf32>, vector<16x128xf32> -> vector<16x128xf32>
    %c0_3 = arith.constant 0 : index
    %c0_4 = arith.constant 0 : index
    %3 = vector.load %arg3[%c0_3, %c0_4] : memref<1x128xf32, #tpu.memory_space<vmem>>, vector<1x128xf32>
    %4 = vector.broadcast %3 : vector<1x128xf32> to vector<16x128xf32>
    %5 = arith.addf %2, %4 : vector<16x128xf32>
    %cst_5 = arith.constant 0.000000e+00 : f32
    %6 = vector.broadcast %cst_5 : f32 to vector<16x128xf32>
    %7 = arith.maximumf %5, %6 : vector<16x128xf32>
    %c0_6 = arith.constant 0 : index
    %c0_7 = arith.constant 0 : index
    %8 = vector.load %arg4[%c0_6, %c0_7] : memref<128x64xf32, #tpu.memory_space<vmem>>, vector<128x64xf32>
    %cst_8 = arith.constant dense<0.000000e+00> : vector<16x64xf32>
    %9 = tpu.matmul %7, %8, %cst_8 {dimension_numbers = #tpu.dot_dimension_numbers<[1], [0], [0], [1], [0, 0, 1, 1], [], []>} : vector<16x128xf32>, vector<128x64xf32>, vector<16x64xf32> -> vector<16x64xf32>
    %c0_9 = arith.constant 0 : index
    %c0_10 = arith.constant 0 : index
    %10 = vector.load %arg5[%c0_9, %c0_10] : memref<1x64xf32, #tpu.memory_space<vmem>>, vector<1x64xf32>
    %11 = vector.broadcast %10 : vector<1x64xf32> to vector<16x64xf32>
    %12 = arith.addf %9, %11 : vector<16x64xf32>
    %c0_11 = arith.constant 0 : index
    %c0_12 = arith.constant 0 : index
    %13 = vector.load %arg6[%c0_11, %c0_12] : memref<16x64xf32, #tpu.memory_space<vmem>>, vector<16x64xf32>
    tpu.vector_store %arg6[%c0_11, %c0_12], %12 {strides = array<i32>} : memref<16x64xf32, #tpu.memory_space<vmem>>, vector<16x64xf32>,
    return
  }
  func.func @transform_0(%arg0: i32) -> (i32, i32) {
    %c0_i32 = arith.constant 0 : i32
    %c0_i32_0 = arith.constant 0 : i32
    return %arg0, %c0_i32 : i32, i32
  }
  func.func @transform_1(%arg0: i32) -> (i32, i32) {
    %c0_i32 = arith.constant 0 : i32
    %c0_i32_0 = arith.constant 0 : i32
    %c0_i32_1 = arith.constant 0 : i32
    return %c0_i32, %c0_i32_0 : i32, i32
  }
  func.func @transform_2(%arg0: i32) -> (i32, i32) {
    %c0_i32 = arith.constant 0 : i32
    %c0_i32_0 = arith.constant 0 : i32
    %c0_i32_1 = arith.constant 0 : i32
    return %c0_i32, %c0_i32_0 : i32, i32
  }
  func.func @transform_3(%arg0: i32) -> (i32, i32) {
    %c0_i32 = arith.constant 0 : i32
    %c0_i32_0 = arith.constant 0 : i32
    %c0_i32_1 = arith.constant 0 : i32
    return %c0_i32, %c0_i32_0 : i32, i32
  }
  func.func @transform_4(%arg0: i32) -> (i32, i32) {
    %c0_i32 = arith.constant 0 : i32
    %c0_i32_0 = arith.constant 0 : i32
    %c0_i32_1 = arith.constant 0 : i32
    return %c0_i32, %c0_i32_0 : i32, i32
  }
  func.func @transform_5(%arg0: i32) -> (i32, i32) {
    %c0_i32 = arith.constant 0 : i32
    %c0_i32_0 = arith.constant 0 : i32
    return %arg0, %c0_i32 : i32, i32
  }
}

</mosaic_0001>

<llo_original>
// kernel: tpu_custom_call.1
$region0: #{tpu_custom_call.1}
  #allocation0 [shape = 'u32[]', space=smem, size = 0x4, offset = 0x4, fixed_abs, tag = 'smem constant byte address 0x4 - core index']
  #allocation1 [shape = 'u32[144,128]{1,0:T(1,128)}', space=vmem, size = 0x12000, scoped, tag = 'internal scratch']
  %s0 = inlined_call_operand.vmem [shape: f32[20,128], index: 0, kind: input, shape index: {}]
  %s1 = inlined_call_operand.vmem [shape: f32[128,128], index: 1, kind: input, shape index: {}]
  %s2 = inlined_call_operand.vmem [shape: f32[1,128], index: 2, kind: input, shape index: {}]
  %s3 = inlined_call_operand.vmem [shape: f32[128,64], index: 3, kind: input, shape index: {}]
  %s4 = inlined_call_operand.vmem [shape: f32[1,64], index: 4, kind: input, shape index: {}]
  %s5 = inlined_call_operand.hbm [shape: f32[20,64], index: 5, kind: output, shape index: {}]
  %s6 = sld [smem:[#allocation0]]
  $region53: #{tpu_custom_call.1} parent=0
    _
  %s8 = ssub.s32 1, %s6
  %s9 = scalar_select 0, %s8, %s6
  $region1: #{tpu_custom_call.1} parent=0
    #allocation2 [shape = 'u8[16384]{0}', space=vmem, size = 0x4000, scoped, tag = 'output window, operand 0']
    #allocation3 [shape = 's32[2]{0}', space=sflag, size = 0x8, scoped, tag = 'scoped memory for tpu_custom_call.1']
    %10 = vsyncpa [#allocation3], 0
    %s11 = scalar_lea.sflag [#allocation3], 1
    %12 = vsyncpa %s11, 0
    loop: start=0, step=1, limit=4
    $region2: #{tpu_custom_call.1} parent=1 // loop_pre_header
      _
    $region3: #{tpu_custom_call.1} parent=1 // loop_header
      %s14 = sphi 0, %s18
      %p15 = scmp.ge.s32.totalorder %s14, 4
      %s24 = sphi 0, %s26
      %s27 = sphi 0, %s24
      %s28 = sphi 0, %s27
      %s44 = sphi 0, %s28
      %s48 = sphi 0, %s48
      %s50 = sphi 0, %s48
      %s51 = sphi 0, %s50
      %s65 = sphi 0, %s51
      %s69 = sphi 0, %s69
      %s71 = sphi 0, %s69
      %s72 = sphi 0, %s71
      %s86 = sphi 0, %s72
      %s90 = sphi 0, %s90
      %s92 = sphi 0, %s90
      %s93 = sphi 0, %s92
      %s107 = sphi 0, %s93
      %s111 = sphi 0, %s111
      %s113 = sphi 0, %s111
      %s114 = sphi 0, %s113
      %s128 = sphi 0, %s114
      %s134 = sphi 0, %s136
      %s137 = sphi 0, %s134
      %s138 = sphi 0, %s137
      %s154 = sphi 0, %s138
    $region4: #{tpu_custom_call.1} parent=1 // loop_header_branch
      %17 = sbr.rel (%p15) target = $region8
    $region5: #{tpu_custom_call.1} parent=1 // loop_body
      %s19 = ssub.s32 %s14, 1
      %s20 = ssub.s32 %s14, 2
      %s21 = sadd.s32 %s14, 1
      %s22 = ssub.s32 %s14, %s21
      %p23 = scmp.eq.s32.totalorder %s22, 0
      %s25 = sadd.s32 %s24, 1
      %s26 = scalar_select %p23, %s24, %s25
      %p29 = pneg %p23
      %p30 = scmp.eq.s32.totalorder %s14, 1
      %p31 = por %p29, %p30
      %p32 = scmp.ne.s32.totalorder %s24, %s27
      %p33 = scmp.eq.s32.totalorder %s14, 0
      %p34 = por %p32, %p33
      %p35 = scmp.ne.s32.totalorder %s24, %s27
      %p36 = scmp.eq.s32.totalorder %s19, 1
      %p37 = por %p35, %p36
      %p38 = scmp.ne.s32.totalorder %s27, %s28
      %p39 = scmp.eq.s32.totalorder %s19, 0
      %p40 = por %p38, %p39
      %p41 = scmp.ne.s32.totalorder %s27, %s28
      %p42 = scmp.eq.s32.totalorder %s20, 1
      %p43 = por %p41, %p42
      %p45 = scmp.ne.s32.totalorder %s28, %s44
      %p46 = scmp.eq.s32.totalorder %s20, 0
      %p47 = por %p45, %p46
      %s49 = sadd.s32 %s48, 1
      %p52 = scmp.eq.s32.totalorder %s14, 1
      %p53 = scmp.ne.s32.totalorder %s48, %s50
      %p54 = scmp.eq.s32.totalorder %s14, 0
      %p55 = por %p53, %p54
      %p56 = scmp.ne.s32.totalorder %s48, %s50
      %p57 = scmp.eq.s32.totalorder %s19, 1
      %p58 = por %p56, %p57
      %p59 = scmp.ne.s32.totalorder %s50, %s51
      %p60 = scmp.eq.s32.totalorder %s19, 0
      %p61 = por %p59, %p60
      %p62 = scmp.ne.s32.totalorder %s50, %s51
      %p63 = scmp.eq.s32.totalorder %s20, 1
      %p64 = por %p62, %p63
      %p66 = scmp.ne.s32.totalorder %s51, %s65
      %p67 = scmp.eq.s32.totalorder %s20, 0
      %p68 = por %p66, %p67
      %s70 = sadd.s32 %s69, 1
      %p73 = scmp.eq.s32.totalorder %s14, 1
      %p74 = scmp.ne.s32.totalorder %s69, %s71
      %p75 = scmp.eq.s32.totalorder %s14, 0
      %p76 = por %p74, %p75
      %p77 = scmp.ne.s32.totalorder %s69, %s71
      %p78 = scmp.eq.s32.totalorder %s19, 1
      %p79 = por %p77, %p78
      %p80 = scmp.ne.s32.totalorder %s71, %s72
      %p81 = scmp.eq.s32.totalorder %s19, 0
      %p82 = por %p80, %p81
      %p83 = scmp.ne.s32.totalorder %s71, %s72
      %p84 = scmp.eq.s32.totalorder %s20, 1
      %p85 = por %p83, %p84
      %p87 = scmp.ne.s32.totalorder %s72, %s86
      %p88 = scmp.eq.s32.totalorder %s20, 0
      %p89 = por %p87, %p88
      %s91 = sadd.s32 %s90, 1
      %p94 = scmp.eq.s32.totalorder %s14, 1
      %p95 = scmp.ne.s32.totalorder %s90, %s92
      %p96 = scmp.eq.s32.totalorder %s14, 0
      %p97 = por %p95, %p96
      %p98 = scmp.ne.s32.totalorder %s90, %s92
      %p99 = scmp.eq.s32.totalorder %s19, 1
      %p100 = por %p98, %p99
      %p101 = scmp.ne.s32.totalorder %s92, %s93
      %p102 = scmp.eq.s32.totalorder %s19, 0
      %p103 = por %p101, %p102
      %p104 = scmp.ne.s32.totalorder %s92, %s93
      %p105 = scmp.eq.s32.totalorder %s20, 1
      %p106 = por %p104, %p105
      %p108 = scmp.ne.s32.totalorder %s93, %s107
      %p109 = scmp.eq.s32.totalorder %s20, 0
      %p110 = por %p108, %p109
      %s112 = sadd.s32 %s111, 1
      %p115 = scmp.eq.s32.totalorder %s14, 1
      %p116 = scmp.ne.s32.totalorder %s111, %s113
      %p117 = scmp.eq.s32.totalorder %s14, 0
      %p118 = por %p116, %p117
      %p119 = scmp.ne.s32.totalorder %s111, %s113
      %p120 = scmp.eq.s32.totalorder %s19, 1
      %p121 = por %p119, %p120
      %p122 = scmp.ne.s32.totalorder %s113, %s114
      %p123 = scmp.eq.s32.totalorder %s19, 0
      %p124 = por %p122, %p123
      %p125 = scmp.ne.s32.totalorder %s113, %s114
      %p126 = scmp.eq.s32.totalorder %s20, 1
      %p127 = por %p125, %p126
      %p129 = scmp.ne.s32.totalorder %s114, %s128
      %p130 = scmp.eq.s32.totalorder %s20, 0
      %p131 = por %p129, %p130
      %s132 = ssub.s32 %s14, %s21
      %p133 = scmp.eq.s32.totalorder %s132, 0
      %s135 = sadd.s32 %s134, 1
      %s136 = scalar_select %p133, %s134, %s135
      %p139 = pneg %p133
      %p140 = scmp.eq.s32.totalorder %s14, 1
      %p141 = por %p139, %p140
      %p142 = scmp.ne.s32.totalorder %s134, %s137
      %p143 = scmp.eq.s32.totalorder %s14, 0
      %p144 = por %p142, %p143
      %p145 = scmp.ne.s32.totalorder %s134, %s137
      %p146 = scmp.eq.s32.totalorder %s19, 1
      %p147 = por %p145, %p146
      %p148 = scmp.ne.s32.totalorder %s137, %s138
      %p149 = scmp.eq.s32.totalorder %s19, 0
      %p150 = por %p148, %p149
      %p151 = scmp.ne.s32.totalorder %s137, %s138
      %p152 = scmp.eq.s32.totalorder %s20, 1
      %p153 = por %p151, %p152
      %p155 = scmp.ne.s32.totalorder %s138, %s154
      %p156 = scmp.eq.s32.totalorder %s20, 0
      %p157 = por %p155, %p156
      %p158 = scmp.le.s32.totalorder 1, %s14
      %p159 = scmp.lt.s32.totalorder %s14, 3
      %p160 = pnand %p158, %p159
      %p161 = pneg %p160
      // Predicated region
      $region9: #{tpu_custom_call.1} parent=5 // pred_check
        _
      $region10: #{tpu_custom_call.1} parent=5 // pred_check_branch
        %163 = sbr.rel (%p160) target = $region12
      $region11: #{tpu_custom_call.1} parent=5 // pred_region
        %s164 = ssub.s32 %s14, 1
        // Predicated region
        $region13: #{tpu_custom_call.1} parent=11 // pred_check
          %p165 = pneg %p61
        $region14: #{tpu_custom_call.1} parent=11 // pred_check_branch
          %167 = sbr.rel (%p165) target = $region16
        $region15: #{tpu_custom_call.1} parent=11 // pred_region
          _
        $region16: #{tpu_custom_call.1} parent=11 // pred_fallthru
          _
        // Predicated region
        $region17: #{tpu_custom_call.1} parent=11 // pred_check
          %p168 = pneg %p82
        $region18: #{tpu_custom_call.1} parent=11 // pred_check_branch
          %170 = sbr.rel (%p168) target = $region20
        $region19: #{tpu_custom_call.1} parent=11 // pred_region
          _
        $region20: #{tpu_custom_call.1} parent=11 // pred_fallthru
          _
        // Predicated region
        $region21: #{tpu_custom_call.1} parent=11 // pred_check
          %p171 = pneg %p103
        $region22: #{tpu_custom_call.1} parent=11 // pred_check_branch
          %173 = sbr.rel (%p171) target = $region24
        $region23: #{tpu_custom_call.1} parent=11 // pred_region
          _
        $region24: #{tpu_custom_call.1} parent=11 // pred_fallthru
          _
        // Predicated region
        $region25: #{tpu_custom_call.1} parent=11 // pred_check
          %p174 = pneg %p124
        $region26: #{tpu_custom_call.1} parent=11 // pred_check_branch
          %176 = sbr.rel (%p174) target = $region28
        $region27: #{tpu_custom_call.1} parent=11 // pred_region
          _
        $region28: #{tpu_custom_call.1} parent=11 // pred_fallthru
          _
      $region12: #{tpu_custom_call.1} parent=5 // pred_fallthru
        _
      %p177 = scmp.lt.s32.totalorder %s14, 2
      // Predicated region
      $region29: #{tpu_custom_call.1} parent=5 // pred_check
        %p178 = pneg %p177
      $region30: #{tpu_custom_call.1} parent=5 // pred_check_branch
        %180 = sbr.rel (%p178) target = $region32
      $region31: #{tpu_custom_call.1} parent=5 // pred_region
        // Predicated region
        $region33: #{tpu_custom_call.1} parent=31 // pred_check
          %p181 = pneg %p34
        $region34: #{tpu_custom_call.1} parent=31 // pred_check_branch
          %183 = sbr.rel (%p181) target = $region36
        $region35: #{tpu_custom_call.1} parent=31 // pred_region
          %s184 = smul.u32 2, %s14
          %s185 = ssub.s32 3, %s184
          %p186 = scmp.lt.s32.totalorder %s185, 2
          %s187 = scalar_select %p186, %s185, 2
          %s188 = smul.u32 128, %s187
          %p189 = scmp.lt.s32.totalorder %s184, 2
          %s190 = scalar_select %p189, %s184, 2
          %s191 = smul.addr %s190, 8
          %s192 = scalar_lea.vmem %s0, %s191
          %s193 = smul.u32 2, %s14
          %s194 = ssub.s32 3, %s193
          %p195 = scmp.lt.s32.totalorder %s194, 2
          %s196 = scalar_select %p195, %s194, 2
          %s197 = smul.u32 128, %s196
        $region36: #{tpu_custom_call.1} parent=31 // pred_fallthru
          _
      $region32: #{tpu_custom_call.1} parent=5 // pred_fallthru
        _
      %p198 = scmp.le.s32.totalorder 1, %s14
      %p199 = scmp.lt.s32.totalorder %s14, 3
      %p200 = pnand %p198, %p199
      %p201 = pneg %p200
      // Predicated region
      $region37: #{tpu_custom_call.1} parent=5 // pred_check
        _
      $region38: #{tpu_custom_call.1} parent=5 // pred_check_branch
        %203 = sbr.rel (%p200) target = $region40
      $region39: #{tpu_custom_call.1} parent=5 // pred_region
        %s204 = ssub.s32 %s14, 1
        %s205 = smul.u32 2, %s19
        %s206 = ssub.s32 3, %s205
        %p207 = scmp.lt.s32.totalorder %s206, 2
        %s208 = scalar_select %p207, %s206, 2
        %s209 = smul.u32 128, %s208
        %p210 = scmp.lt.s32.totalorder %s205, 2
        %s211 = scalar_select %p210, %s205, 2
        %s212 = smul.addr %s211, 8
        %s213 = scalar_lea.vmem %s0, %s212
        %p214 = pneg %p40
        %p215 = pneg %p37
        %p216 = pneg %p61
        %p217 = pneg %p58
        %p218 = pneg %p82
        %p219 = pneg %p79
        %p220 = pneg %p103
        %p221 = pneg %p100
        %p222 = pneg %p124
        %p223 = pneg %p121
        %p224 = pneg %p150
        %p225 = pneg %p147
        %s226 = sand.u32 %s137, 1
        %s227 = scalar_lea.sflag [#allocation3], %s226
        %s228 = sand.u32 %s137, 1
        %s229 = smul.addr %s228, 16
        %s230 = scalar_lea.vmem [#allocation2], %s229
        %s231 = smul.u32 2, %s19
        %s232 = ssub.s32 3, %s231
        %p233 = scmp.lt.s32.totalorder %s232, 2
        %s234 = scalar_select %p233, %s232, 2
        %s235 = smul.u32 128, %s234
        %p236 = scmp.lt.s32.totalorder %s231, 2
        %s237 = scalar_select %p236, %s231, 2
        %s238 = smul.addr %s237, 8
        %s239 = scalar_lea.vmem %s0, %s238
        %s240 = smul.u32 2, %s19
        %s241 = ssub.s32 3, %s240
        %p242 = scmp.lt.s32.totalorder %s241, 2
        %s243 = scalar_select %p242, %s241, 2
        %s244 = smul.u32 128, %s243
        %s245 = smul.u32 2, %s19
        %s246 = ssub.s32 3, %s245
        %p247 = scmp.lt.s32.totalorder %s246, 2
        %s248 = scalar_select %p247, %s246, 2
        %s249 = smul.u32 128, %s248
        %v250 = vld [vmem:[%s239] sm:$0xff]
        %v251 = vld [vmem:[%s239 + $0x8] sm:$0xff]
        %v252 = vld [vmem:[%s1] sm:$0xff]
        %v253 = vld [vmem:[%s1 + $0x8] sm:$0xff]
        %v254 = vld [vmem:[%s1 + $0x10] sm:$0xff]
        %v255 = vld [vmem:[%s1 + $0x18] sm:$0xff]
        %v256 = vld [vmem:[%s1 + $0x20] sm:$0xff]
        %v257 = vld [vmem:[%s1 + $0x28] sm:$0xff]
        %v258 = vld [vmem:[%s1 + $0x30] sm:$0xff]
        %v259 = vld [vmem:[%s1 + $0x38] sm:$0xff]
        %v260 = vld [vmem:[%s1 + $0x40] sm:$0xff]
        %v261 = vld [vmem:[%s1 + $0x48] sm:$0xff]
        %v262 = vld [vmem:[%s1 + $0x50] sm:$0xff]
        %v263 = vld [vmem:[%s1 + $0x58] sm:$0xff]
        %v264 = vld [vmem:[%s1 + $0x60] sm:$0xff]
        %v265 = vld [vmem:[%s1 + $0x68] sm:$0xff]
        %v266 = vld [vmem:[%s1 + $0x70] sm:$0xff]
        %v267 = vld [vmem:[%s1 + $0x78] sm:$0xff]
        %v268 = vld [vmem:[%s2] sm:$0x1]
        %v270 = vlaneseq
        %v271 = vshrl.u32 %v270, 7
        %v272 = vsub.s32 0, %v271
        %v273 = vrot.slane %v268, %v272
        %275 = vmatprep.subr.mxu0 0.0
        %276 = vmatpush1.msra.mxu0 %v267
        %277 = vmatprep.subr.mxu0 0.0
        %278 = vmatpush1.msra.mxu0 %v266
        %279 = vmatprep.subr.mxu0 0.0
        %280 = vmatpush1.msra.mxu0 %v265
        %281 = vmatprep.subr.mxu0 0.0
        %282 = vmatpush1.msra.mxu0 %v264
        %283 = vmatprep.subr.mxu0 0.0
        %284 = vmatpush1.msra.mxu0 %v263
        %285 = vmatprep.subr.mxu0 0.0
        %286 = vmatpush1.msra.mxu0 %v262
        %287 = vmatprep.subr.mxu0 0.0
        %288 = vmatpush1.msra.mxu0 %v261
        %289 = vmatprep.subr.mxu0 0.0
        %290 = vmatpush1.msra.mxu0 %v260
        %291 = vmatprep.subr.mxu0 0.0
        %292 = vmatpush1.msra.mxu0 %v259
        %293 = vmatprep.subr.mxu0 0.0
        %294 = vmatpush1.msra.mxu0 %v258
        %295 = vmatprep.subr.mxu0 0.0
        %296 = vmatpush1.msra.mxu0 %v257
        %297 = vmatprep.subr.mxu0 0.0
        %298 = vmatpush1.msra.mxu0 %v256
        %299 = vmatprep.subr.mxu0 0.0
        %300 = vmatpush1.msra.mxu0 %v255
        %301 = vmatprep.subr.mxu0 0.0
        %302 = vmatpush1.msra.mxu0 %v254
        %303 = vmatprep.subr.mxu0 0.0
        %304 = vmatpush1.msra.mxu0 %v253
        %305 = vmatprep.subr.mxu0 0.0
        %306 = vmatpush1.msra.mxu0 %v252
        %307 = vmatprep.subr.mxu0 0.0
        %308 = vmatpush2.msra.mxu0 0.0
        %309 = vmatprep.subr.mxu0 0.0
        %310 = vmatpush2.msra.mxu0 0.0
        %311 = vmatprep.subr.mxu0 0.0
        %312 = vmatpush2.msra.mxu0 0.0
        %313 = vmatprep.subr.mxu0 0.0
        %314 = vmatpush2.msra.mxu0 0.0
        %315 = vmatprep.subr.mxu0 0.0
        %316 = vmatpush2.msra.mxu0 0.0
        %317 = vmatprep.subr.mxu0 0.0
        %318 = vmatpush2.msra.mxu0 0.0
        %319 = vmatprep.subr.mxu0 0.0
        %320 = vmatpush2.msra.mxu0 0.0
        %321 = vmatprep.subr.mxu0 0.0
        %322 = vmatpush2.msra.mxu0 0.0
        %323 = vmatprep.subr.mxu0 0.0
        %324 = vmatpush2.msra.mxu0 0.0
        %325 = vmatprep.subr.mxu0 0.0
        %326 = vmatpush2.msra.mxu0 0.0
        %327 = vmatprep.subr.mxu0 0.0
        %328 = vmatpush2.msra.mxu0 0.0
        %329 = vmatprep.subr.mxu0 0.0
        %330 = vmatpush2.msra.mxu0 0.0
        %331 = vmatprep.subr.mxu0 0.0
        %332 = vmatpush2.msra.mxu0 0.0
        %333 = vmatprep.subr.mxu0 0.0
        %334 = vmatpush2.msra.mxu0 0.0
        %335 = vmatprep.subr.mxu0 0.0
        %336 = vmatpush2.msra.mxu0 0.0
        %337 = vmatprep.subr.mxu0 0.0
        %338 = vmatpush2.msra.mxu0 0.0
        %339 = vmatprep.mubr.f32.mxu0 0.0
        %340 = vmatmul.mubr.f32.gmra.mxu0 %v250
        %v341 = vpop.f32.mrf.mxu0
        %v342 = vadd.f32 %v273, %v341
        %v343 = vpop.f32.mrf.mxu0
        %344 = vmatprep.mubr.f32.mxu0 0.0
        %345 = vmatmul.mubr.f32.gmra.mxu0 %v251
        %v346 = vpop.f32.mrf.mxu0
        %v347 = vadd.f32 %v273, %v346
        %v348 = vpop.f32.mrf.mxu0
        %349 = vdwg.mxu0
        %v350 = vmax.f32 %v342, 0.0
        %v351 = vmax.f32 %v347, 0.0
        %v352 = vld [vmem:[%s3] sm:$0xff]
        %v353 = vld [vmem:[%s3 + $0x8] sm:$0xff]
        %v354 = vld [vmem:[%s3 + $0x10] sm:$0xff]
        %v355 = vld [vmem:[%s3 + $0x18] sm:$0xff]
        %v356 = vld [vmem:[%s3 + $0x20] sm:$0xff]
        %v357 = vld [vmem:[%s3 + $0x28] sm:$0xff]
        %v358 = vld [vmem:[%s3 + $0x30] sm:$0xff]
        %v359 = vld [vmem:[%s3 + $0x38] sm:$0xff]
        %v360 = vld [vmem:[%s3 + $0x40] sm:$0xff]
        %v361 = vld [vmem:[%s3 + $0x48] sm:$0xff]
        %v362 = vld [vmem:[%s3 + $0x50] sm:$0xff]
        %v363 = vld [vmem:[%s3 + $0x58] sm:$0xff]
        %v364 = vld [vmem:[%s3 + $0x60] sm:$0xff]
        %v365 = vld [vmem:[%s3 + $0x68] sm:$0xff]
        %v366 = vld [vmem:[%s3 + $0x70] sm:$0xff]
        %v367 = vld [vmem:[%s3 + $0x78] sm:$0xff]
        %v368 = vld [vmem:[%s4] sm:$0x1]
        %v370 = vlaneseq
        %v371 = vshrl.u32 %v370, 7
        %v372 = vsub.s32 0, %v371
        %v373 = vrot.slane %v368, %v372
        %375 = vmatprep.subr.mxu0 0.0
        %376 = vmatpush1.msra.mxu0 %v367
        %377 = vmatprep.subr.mxu0 0.0
        %378 = vmatpush1.msra.mxu0 %v366
        %379 = vmatprep.subr.mxu0 0.0
        %380 = vmatpush1.msra.mxu0 %v365
        %381 = vmatprep.subr.mxu0 0.0
        %382 = vmatpush1.msra.mxu0 %v364
        %383 = vmatprep.subr.mxu0 0.0
        %384 = vmatpush1.msra.mxu0 %v363
        %385 = vmatprep.subr.mxu0 0.0
        %386 = vmatpush1.msra.mxu0 %v362
        %387 = vmatprep.subr.mxu0 0.0
        %388 = vmatpush1.msra.mxu0 %v361
        %389 = vmatprep.subr.mxu0 0.0
        %390 = vmatpush1.msra.mxu0 %v360
        %391 = vmatprep.subr.mxu0 0.0
        %392 = vmatpush1.msra.mxu0 %v359
        %393 = vmatprep.subr.mxu0 0.0
        %394 = vmatpush1.msra.mxu0 %v358
        %395 = vmatprep.subr.mxu0 0.0
        %396 = vmatpush1.msra.mxu0 %v357
        %397 = vmatprep.subr.mxu0 0.0
        %398 = vmatpush1.msra.mxu0 %v356
        %399 = vmatprep.subr.mxu0 0.0
        %400 = vmatpush1.msra.mxu0 %v355
        %401 = vmatprep.subr.mxu0 0.0
        %402 = vmatpush1.msra.mxu0 %v354
        %403 = vmatprep.subr.mxu0 0.0
        %404 = vmatpush1.msra.mxu0 %v353
        %405 = vmatprep.subr.mxu0 0.0
        %406 = vmatpush1.msra.mxu0 %v352
        %407 = vmatprep.subr.mxu0 0.0
        %408 = vmatpush2.msra.mxu0 0.0
        %409 = vmatprep.subr.mxu0 0.0
        %410 = vmatpush2.msra.mxu0 0.0
        %411 = vmatprep.subr.mxu0 0.0
        %412 = vmatpush2.msra.mxu0 0.0
        %413 = vmatprep.subr.mxu0 0.0
        %414 = vmatpush2.msra.mxu0 0.0
        %415 = vmatprep.subr.mxu0 0.0
        %416 = vmatpush2.msra.mxu0 0.0
        %417 = vmatprep.subr.mxu0 0.0
        %418 = vmatpush2.msra.mxu0 0.0
        %419 = vmatprep.subr.mxu0 0.0
        %420 = vmatpush2.msra.mxu0 0.0
        %421 = vmatprep.subr.mxu0 0.0
        %422 = vmatpush2.msra.mxu0 0.0
        %423 = vmatprep.subr.mxu0 0.0
        %424 = vmatpush2.msra.mxu0 0.0
        %425 = vmatprep.subr.mxu0 0.0
        %426 = vmatpush2.msra.mxu0 0.0
        %427 = vmatprep.subr.mxu0 0.0
        %428 = vmatpush2.msra.mxu0 0.0
        %429 = vmatprep.subr.mxu0 0.0
        %430 = vmatpush2.msra.mxu0 0.0
        %431 = vmatprep.subr.mxu0 0.0
        %432 = vmatpush2.msra.mxu0 0.0
        %433 = vmatprep.subr.mxu0 0.0
        %434 = vmatpush2.msra.mxu0 0.0
        %435 = vmatprep.subr.mxu0 0.0
        %436 = vmatpush2.msra.mxu0 0.0
        %437 = vmatprep.subr.mxu0 0.0
        %438 = vmatpush2.msra.mxu0 0.0
        %439 = vmatprep.mubr.f32.mxu0 0.0
        %440 = vmatmul.mubr.f32.gmra.mxu0 %v350
        %v441 = vpop.f32.mrf.mxu0
        %v442 = vadd.f32 %v373, %v441
        %v443 = vpop.f32.mrf.mxu0
        %444 = vmatprep.mubr.f32.mxu0 0.0
        %445 = vmatmul.mubr.f32.gmra.mxu0 %v351
        %v446 = vpop.f32.mrf.mxu0
        %v447 = vadd.f32 %v373, %v446
        %v448 = vpop.f32.mrf.mxu0
        %449 = vdwg.mxu0
        %vm450 = vcmask 523264
        %451 = vst.msk [vmem:[%s230] sm:$0xff] %vm450, %v442
        %452 = vst.msk [vmem:[%s230 + $0x8] sm:$0xff] %vm450, %v447
        %s453 = sand.u32 %s137, 1
        %s454 = scalar_lea.sflag [#allocation3], %s453
        %s455 = sand.u32 %s137, 1
        %s456 = smul.addr %s455, 16
        %s457 = scalar_lea.vmem [#allocation2], %s456
        // Predicated region
        $region41: #{tpu_custom_call.1} parent=39 // pred_check
          %p458 = pneg %p147
        $region42: #{tpu_custom_call.1} parent=39 // pred_check_branch
          %460 = sbr.rel (%p458) target = $region44
        $region43: #{tpu_custom_call.1} parent=39 // pred_region
          %s461 = smul.u32 2, %s19
          %s462 = ssub.s32 3, %s461
          %p463 = scmp.lt.s32.totalorder %s462, 2
          %s464 = scalar_select %p463, %s462, 2
          %s465 = smul.u32 128, %s464
          %s467 = ssub.s32 256, %s465
          %468 = vsyncadd %s454, %s467
          %p469 = scmp.ne.s32.totalorder 0, %s465
          %s470 = smul.addr %s461, 128
          %s471 = scalar_lea.hbm %s5, %s470
          %s472 = smul.u32 8, %s464
          %s473 = sshll.u32 %s457, 4
          %s474 = int_to_ptr.vmem [resolvable:$true] %s473
          %s475 = sshll.u32 %s472, 4
          %479 = dma.vmem_to_hbm [thread:$0]  (%p469), %s474, %s475, %s471, %s454, 128, 128, 8
        $region44: #{tpu_custom_call.1} parent=39 // pred_fallthru
          _
      $region40: #{tpu_custom_call.1} parent=5 // pred_fallthru
        _
      %p480 = scmp.le.s32.totalorder 2, %s14
      // Predicated region
      $region45: #{tpu_custom_call.1} parent=5 // pred_check
        %p481 = pneg %p480
      $region46: #{tpu_custom_call.1} parent=5 // pred_check_branch
        %483 = sbr.rel (%p481) target = $region48
      $region47: #{tpu_custom_call.1} parent=5 // pred_region
        %s484 = ssub.s32 %s14, 2
        // Predicated region
        $region49: #{tpu_custom_call.1} parent=47 // pred_check
          %p485 = pneg %p153
        $region50: #{tpu_custom_call.1} parent=47 // pred_check_branch
          %487 = sbr.rel (%p485) target = $region52
        $region51: #{tpu_custom_call.1} parent=47 // pred_region
          %s488 = sand.u32 %s138, 1
          %s489 = scalar_lea.sflag [#allocation3], %s488
          %s490 = sand.u32 %s138, 1
          %s491 = smul.addr %s490, 16
          %s492 = scalar_lea.vmem [#allocation2], %s491
          %493 = dma.done %s489, 256
        $region52: #{tpu_custom_call.1} parent=47 // pred_fallthru
          _
      $region48: #{tpu_custom_call.1} parent=5 // pred_fallthru
        _
    $region6: #{tpu_custom_call.1} parent=1 // loop_footer
      %s18 = sadd.s32 1, %s14
    $region7: #{tpu_custom_call.1} parent=1 // loop_footer_branch
      %13 = sbr.rel target = $region3
    $region8: #{tpu_custom_call.1} parent=1 // loop_exit
      _
    %494 = vsyncpa [#allocation3], 1
    %s495 = scalar_lea.sflag [#allocation3], 1
    %496 = vsyncpa %s495, 1

</llo_original>
